<compile_context>
chip_gen: v7x
topology: tpu7x:2x2x1
jax: 0.10.0
libtpu: 0.0.40
codegen_flags: <defaults>
</compile_context>

<pallas_src>
import math

import jax
import jax.numpy as jnp
from jax.experimental import pallas as pl
from jax.experimental.pallas import tpu as pltpu

LANE = 128      # vreg lane width (last dim)
SUBLANE = 8     # f32 sublane width (second-to-last dim)


def _round_up(x, m):
    return ((x + m - 1) // m) * m


def _pad_to(x, shape):
    pads = [(0, s - d) for d, s in zip(x.shape, shape)]
    if all(p == (0, 0) for p in pads):
        return x
    return jnp.pad(x, pads)


def _choose_group(batch, t, *, target_rows=512, a_vmem_budget=16 * 1024 * 1024):
    """Batch elements per grid step.

    Big enough that bb*T fills the MXU M-dim (targets >=256 rows when the batch
    allows it), small enough that the double-buffered bf16 adjacency block stays
    inside an explicit VMEM budget, and leaving >= 2 grid steps so v7x megacore
    can shard the 'parallel' axis across its two TensorCores.
    """
    bb = max(1, target_rows // max(t, 1))
    while bb > 1 and 2 * bb * t * t * 2 > a_vmem_budget:   # 2 buffers * bf16
        bb -= 1
    bb = min(bb, batch)
    if batch >= 2:
        bb = min(bb, -(-batch // 2))        # keep at least 2 grid steps
    num_groups = -(-batch // bb)
    return bb, num_groups


def skip_graph_conv_kernel(x_ref, a_ref,
                           w0_ref, b0_ref, w1_ref, b1_ref,
                           m0_ref, mb0_ref, m1_ref, mb1_ref,
                           o_ref):
    """One grid step = one group of `bb` batch elements, all resident in VMEM."""
    bb, t, dp = x_ref.shape
    hp = w0_ref.shape[1]
    op = m1_ref.shape[1]
    rows = bb * t

    a = a_ref[...]                                    # (bb, t, t)  bf16
    x = x_ref[...]                                    # (bb, t, dp) bf16

    # ---- GraphConv layer 0: ReLU(A @ X @ W0 + b0) ---------------------------
    # Contract against the narrower feature dim first (fewer MXU FLOPs).
    if dp <= hp:
        ax = jnp.einsum("btk,bkd->btd", a, x,
                        preferred_element_type=jnp.float32)
        h = jnp.dot(ax.reshape(rows, dp).astype(jnp.bfloat16), w0_ref[...],
                    preferred_element_type=jnp.float32)
    else:
        xw = jnp.dot(x.reshape(rows, dp), w0_ref[...],
                     preferred_element_type=jnp.float32)
        h = jnp.einsum("btk,bkd->btd", a,
                       xw.reshape(bb, t, hp).astype(jnp.bfloat16),
                       preferred_element_type=jnp.float32).reshape(rows, hp)
    h = jnp.maximum(h + b0_ref[...], 0.0)             # (rows, hp) f32

    # ---- GraphConv layer 1: ReLU(A @ H @ W1 + b1) ---------------------------
    ah = jnp.einsum("btk,bkd->btd", a,
                    h.astype(jnp.bfloat16).reshape(bb, t, hp),
                    preferred_element_type=jnp.float32)
    h = jnp.dot(ah.reshape(rows, hp).astype(jnp.bfloat16), w1_ref[...],
                preferred_element_type=jnp.float32)
    h = jnp.maximum(h + b1_ref[...], 0.0)

    # ---- MLP layer 0: ReLU(H @ M0 + mb0) ------------------------------------
    h = jnp.dot(h.astype(jnp.bfloat16), m0_ref[...],
                preferred_element_type=jnp.float32)
    h = jnp.maximum(h + mb0_ref[...], 0.0)

    # ---- MLP layer 1 (output head, no activation) ---------------------------
    h = jnp.dot(h.astype(jnp.bfloat16), m1_ref[...],
                preferred_element_type=jnp.float32)
    h = h + mb1_ref[...]

    o_ref[...] = h.reshape(bb, t, op).astype(o_ref.dtype)


def skip_graph_conv(features, A, params, *, target_rows=512):
    """features: (B, T, D) float32; A: (B, T, T) float32."""
    B, T, D = features.shape
    H = params["w0"].shape[1]
    O = params["m1"].shape[1]

    # Lane/sublane-dense padding (zeros contribute nothing to any matmul).
    Dp = _round_up(D, LANE)
    Hp = _round_up(H, LANE)
    Op = _round_up(O, LANE)
    Tp = _round_up(T, SUBLANE)

    bb, num_groups = _choose_group(B, Tp, target_rows=target_rows)
    Bp = bb * num_groups

    bf = jnp.bfloat16
    x = _pad_to(features, (Bp, Tp, Dp)).astype(bf)
    a = _pad_to(A, (Bp, Tp, Tp)).astype(bf)
    w0 = _pad_to(params["w0"], (Dp, Hp)).astype(bf)
    b0 = _pad_to(params["b0"], (1, Hp))
    w1 = _pad_to(params["w1"], (Hp, Hp)).astype(bf)
    b1 = _pad_to(params["b1"], (1, Hp))
    m0 = _pad_to(params["m0"], (Hp, Hp)).astype(bf)
    mb0 = _pad_to(params["mb0"], (1, Hp))
    m1 = _pad_to(params["m1"], (Hp, Op)).astype(bf)
    mb1 = _pad_to(params["mb1"], (1, Op))

    def fixed(shape):
        # Whole weight/bias resident each grid step (constant block index, so
        # it is not re-DMA'd between steps).
        return pl.BlockSpec(shape, lambda g: tuple(0 for _ in shape))

    out = pl.pallas_call(
        skip_graph_conv_kernel,
        out_shape=jax.ShapeDtypeStruct((Bp, Tp, Op), jnp.float32),
        grid=(num_groups,),
        in_specs=[
            pl.BlockSpec((bb, Tp, Dp), lambda g: (g, 0, 0)),   # features group
            pl.BlockSpec((bb, Tp, Tp), lambda g: (g, 0, 0)),   # adjacency group
            fixed((Dp, Hp)), fixed((1, Hp)),                   # GCN layer 0
            fixed((Hp, Hp)), fixed((1, Hp)),                   # GCN layer 1
            fixed((Hp, Hp)), fixed((1, Hp)),                   # MLP layer 0
            fixed((Hp, Op)), fixed((1, Op)),                   # MLP layer 1
        ],
        out_specs=pl.BlockSpec((bb, Tp, Op), lambda g: (g, 0, 0)),
        compiler_params=pltpu.CompilerParams(
            dimension_semantics=("parallel",)),
    )(x, a, w0, b0, w1, b1, m0, mb0, m1, mb1)

    return out[:B, :T, :O].astype(features.dtype)


def xavier_uniform(key, fan_in, fan_out):
    bound = math.sqrt(6.0 / (fan_in + fan_out))
    return jax.random.uniform(key, (fan_in, fan_out), jnp.float32, -bound, bound)


def linear_default(key, fan_in, fan_out):
    # nn.Linear default: U(-1/sqrt(fan_in), 1/sqrt(fan_in))
    bound = 1.0 / math.sqrt(fan_in)
    return jax.random.uniform(key, (fan_in, fan_out), jnp.float32, -bound, bound)


def init_params(key, in_dim, hidden_dim, out_dim):
    k = jax.random.split(key, 6)
    return {
        # GraphConv: default nn.Linear-style init (weights + biases)
        "w0": linear_default(k[0], in_dim, hidden_dim),
        "b0": jax.random.uniform(k[1], (1, hidden_dim), jnp.float32,
                                 -1.0 / math.sqrt(in_dim), 1.0 / math.sqrt(in_dim)),
        "w1": linear_default(k[2], hidden_dim, hidden_dim),
        "b1": jax.random.uniform(k[3], (1, hidden_dim), jnp.float32,
                                 -1.0 / math.sqrt(hidden_dim), 1.0 / math.sqrt(hidden_dim)),
        # MLP: xavier_uniform_ weights, zero biases (matches the module's __init__)
        "m0": xavier_uniform(k[4], hidden_dim, hidden_dim),
        "mb0": jnp.zeros((1, hidden_dim), jnp.float32),
        "m1": xavier_uniform(k[5], hidden_dim, out_dim),
        "mb1": jnp.zeros((1, out_dim), jnp.float32),
    }


def reference_forward(features, A, p):
    """Pure-JAX reference mirroring the kernel's bf16-operand / f32-accumulate
    dtype flow, so the comparison isolates the Pallas lowering."""
    bf, f32 = jnp.bfloat16, jnp.float32
    a = A.astype(bf)

    def gcn(h_bf, w, b):
        ah = jnp.einsum("btk,bkd->btd", a, h_bf, preferred_element_type=f32)
        h = jnp.einsum("btd,dh->bth", ah.astype(bf), w.astype(bf),
                       preferred_element_type=f32)
        return jax.nn.relu(h + b)

    h = gcn(features.astype(bf), p["w0"], p["b0"])
    h = gcn(h.astype(bf), p["w1"], p["b1"])
    h = jnp.einsum("btd,dh->bth", h.astype(bf), p["m0"].astype(bf),
                   preferred_element_type=f32)
    h = jax.nn.relu(h + p["mb0"])
    h = jnp.einsum("btd,dh->bth", h.astype(bf), p["m1"].astype(bf),
                   preferred_element_type=f32)
    return h + p["mb1"]


if __name__ == "__main__":
    B, T, D = 2, 8, 16          # batch, nodes/timesteps, input feature dim
    HIDDEN, OUT = 32, 16        # num_layers = 2 (fixed in the kernel)

    key = jax.random.PRNGKey(0)
    kx, ka, kp = jax.random.split(key, 3)

    features = jax.random.normal(kx, (B, T, D), jnp.float32)
    # Row-normalized dense adjacency (self-loops included), as a generic A.
    A_raw = jax.random.uniform(ka, (B, T, T), jnp.float32) + jnp.eye(T)
    A = A_raw / jnp.sum(A_raw, axis=-1, keepdims=True)

    params = init_params(kp, D, HIDDEN, OUT)

    out = skip_graph_conv(features, A, params)
    out = jax.block_until_ready(out)

    ref = reference_forward(features, A, params)
    assert out.shape == (B, T, OUT)
    assert jnp.allclose(out, ref, atol=2e-2, rtol=2e-2), \
        float(jnp.max(jnp.abs(out - ref)))

    print("KERNEL_OK")
</pallas_src>

<mosaic_0001>
module attributes {stable_mosaic.version = 11 : i64} {
  func.func @skip_graph_conv_kernel(%arg0: i32, %arg1: memref<1x8x128xbf16, #tpu.memory_space<vmem>>, %arg2: memref<1x8x8xbf16, #tpu.memory_space<vmem>>, %arg3: memref<128x128xbf16, #tpu.memory_space<vmem>>, %arg4: memref<1x128xf32, #tpu.memory_space<vmem>>, %arg5: memref<128x128xbf16, #tpu.memory_space<vmem>>, %arg6: memref<1x128xf32, #tpu.memory_space<vmem>>, %arg7: memref<128x128xbf16, #tpu.memory_space<vmem>>, %arg8: memref<1x128xf32, #tpu.memory_space<vmem>>, %arg9: memref<128x128xbf16, #tpu.memory_space<vmem>>, %arg10: memref<1x128xf32, #tpu.memory_space<vmem>>, %arg11: memref<1x8x128xf32, #tpu.memory_space<vmem>>) attributes {dimension_semantics = [#tpu.dimension_semantics<parallel>], iteration_bounds = array<i64: 2>, scalar_prefetch = 0 : i64, scratch_operands = 0 : i64, tpu.core_type = #tpu.core_type<tc>, window_params = [{transform_indices = @transform_0, window_bounds = array<i64: 1, 8, 128>}, {transform_indices = @transform_1, window_bounds = array<i64: 1, 8, 8>}, {pipeline_mode = #tpu.pipeline_mode<synchronous>, transform_indices = @transform_2, window_bounds = array<i64: 128, 128>}, {pipeline_mode = #tpu.pipeline_mode<synchronous>, transform_indices = @transform_3, window_bounds = array<i64: 1, 128>}, {pipeline_mode = #tpu.pipeline_mode<synchronous>, transform_indices = @transform_4, window_bounds = array<i64: 128, 128>}, {pipeline_mode = #tpu.pipeline_mode<synchronous>, transform_indices = @transform_5, window_bounds = array<i64: 1, 128>}, {pipeline_mode = #tpu.pipeline_mode<synchronous>, transform_indices = @transform_6, window_bounds = array<i64: 128, 128>}, {pipeline_mode = #tpu.pipeline_mode<synchronous>, transform_indices = @transform_7, window_bounds = array<i64: 1, 128>}, {pipeline_mode = #tpu.pipeline_mode<synchronous>, transform_indices = @transform_8, window_bounds = array<i64: 128, 128>}, {pipeline_mode = #tpu.pipeline_mode<synchronous>, transform_indices = @transform_9, window_bounds = array<i64: 1, 128>}, {transform_indices = @transform_10, window_bounds = array<i64: 1, 8, 128>}]} {
    %c0 = arith.constant 0 : index
    %c0_0 = arith.constant 0 : index
    %c0_1 = arith.constant 0 : index
    %0 = vector.load %arg2[%c0, %c0_0, %c0_1] : memref<1x8x8xbf16, #tpu.memory_space<vmem>>, vector<1x8x8xbf16>
    %c0_2 = arith.constant 0 : index
    %c0_3 = arith.constant 0 : index
    %c0_4 = arith.constant 0 : index
    %1 = vector.load %arg1[%c0_2, %c0_3, %c0_4] : memref<1x8x128xbf16, #tpu.memory_space<vmem>>, vector<1x8x128xbf16>
    "tpu.trace_start"() <{level = 10 : i32, message = "btk,bkd->btd"}> : () -> ()
    %cst = arith.constant dense<0.000000e+00> : vector<1x8x128xf32>
    %2 = tpu.matmul %0, %1, %cst {dimension_numbers = #tpu.dot_dimension_numbers<[2], [1], [1], [2], [0, 0, 0, 1, 1, 2], [0], [0]>} : vector<1x8x8xbf16>, vector<1x8x128xbf16>, vector<1x8x128xf32> -> vector<1x8x128xf32>
    "tpu.trace_stop"() : () -> ()
    %3 = vector.shape_cast %2 : vector<1x8x128xf32> to vector<8x128xf32>
    %4 = arith.truncf %3 : vector<8x128xf32> to vector<8x128xbf16>
    %c0_5 = arith.constant 0 : index
    %c0_6 = arith.constant 0 : index
    %5 = vector.load %arg3[%c0_5, %c0_6] : memref<128x128xbf16, #tpu.memory_space<vmem>>, vector<128x128xbf16>
    %cst_7 = arith.constant dense<0.000000e+00> : vector<8x128xf32>
    %6 = tpu.matmul %4, %5, %cst_7 {dimension_numbers = #tpu.dot_dimension_numbers<[1], [0], [0], [1], [0, 0, 1, 1], [], []>} : vector<8x128xbf16>, vector<128x128xbf16>, vector<8x128xf32> -> vector<8x128xf32>
    %c0_8 = arith.constant 0 : index
    %c0_9 = arith.constant 0 : index
    %7 = vector.load %arg4[%c0_8, %c0_9] : memref<1x128xf32, #tpu.memory_space<vmem>>, vector<1x128xf32>
    %8 = vector.broadcast %7 : vector<1x128xf32> to vector<8x128xf32>
    %9 = arith.addf %6, %8 : vector<8x128xf32>
    %cst_10 = arith.constant 0.000000e+00 : f32
    %10 = vector.broadcast %cst_10 : f32 to vector<8x128xf32>
    %11 = arith.maximumf %9, %10 : vector<8x128xf32>
    %12 = arith.truncf %11 : vector<8x128xf32> to vector<8x128xbf16>
    %13 = vector.shape_cast %12 : vector<8x128xbf16> to vector<1x8x128xbf16>
    "tpu.trace_start"() <{level = 10 : i32, message = "btk,bkd->btd"}> : () -> ()
    %cst_11 = arith.constant dense<0.000000e+00> : vector<1x8x128xf32>
    %14 = tpu.matmul %0, %13, %cst_11 {dimension_numbers = #tpu.dot_dimension_numbers<[2], [1], [1], [2], [0, 0, 0, 1, 1, 2], [0], [0]>} : vector<1x8x8xbf16>, vector<1x8x128xbf16>, vector<1x8x128xf32> -> vector<1x8x128xf32>
    "tpu.trace_stop"() : () -> ()
    %15 = vector.shape_cast %14 : vector<1x8x128xf32> to vector<8x128xf32>
    %16 = arith.truncf %15 : vector<8x128xf32> to vector<8x128xbf16>
    %c0_12 = arith.constant 0 : index
    %c0_13 = arith.constant 0 : index
    %17 = vector.load %arg5[%c0_12, %c0_13] : memref<128x128xbf16, #tpu.memory_space<vmem>>, vector<128x128xbf16>
    %cst_14 = arith.constant dense<0.000000e+00> : vector<8x128xf32>
    %18 = tpu.matmul %16, %17, %cst_14 {dimension_numbers = #tpu.dot_dimension_numbers<[1], [0], [0], [1], [0, 0, 1, 1], [], []>} : vector<8x128xbf16>, vector<128x128xbf16>, vector<8x128xf32> -> vector<8x128xf32>
    %c0_15 = arith.constant 0 : index
    %c0_16 = arith.constant 0 : index
    %19 = vector.load %arg6[%c0_15, %c0_16] : memref<1x128xf32, #tpu.memory_space<vmem>>, vector<1x128xf32>
    %20 = vector.broadcast %19 : vector<1x128xf32> to vector<8x128xf32>
    %21 = arith.addf %18, %20 : vector<8x128xf32>
    %cst_17 = arith.constant 0.000000e+00 : f32
    %22 = vector.broadcast %cst_17 : f32 to vector<8x128xf32>
    %23 = arith.maximumf %21, %22 : vector<8x128xf32>
    %24 = arith.truncf %23 : vector<8x128xf32> to vector<8x128xbf16>
    %c0_18 = arith.constant 0 : index
    %c0_19 = arith.constant 0 : index
    %25 = vector.load %arg7[%c0_18, %c0_19] : memref<128x128xbf16, #tpu.memory_space<vmem>>, vector<128x128xbf16>
    %cst_20 = arith.constant dense<0.000000e+00> : vector<8x128xf32>
    %26 = tpu.matmul %24, %25, %cst_20 {dimension_numbers = #tpu.dot_dimension_numbers<[1], [0], [0], [1], [0, 0, 1, 1], [], []>} : vector<8x128xbf16>, vector<128x128xbf16>, vector<8x128xf32> -> vector<8x128xf32>
    %c0_21 = arith.constant 0 : index
    %c0_22 = arith.constant 0 : index
    %27 = vector.load %arg8[%c0_21, %c0_22] : memref<1x128xf32, #tpu.memory_space<vmem>>, vector<1x128xf32>
    %28 = vector.broadcast %27 : vector<1x128xf32> to vector<8x128xf32>
    %29 = arith.addf %26, %28 : vector<8x128xf32>
    %cst_23 = arith.constant 0.000000e+00 : f32
    %30 = vector.broadcast %cst_23 : f32 to vector<8x128xf32>
    %31 = arith.maximumf %29, %30 : vector<8x128xf32>
    %32 = arith.truncf %31 : vector<8x128xf32> to vector<8x128xbf16>
    %c0_24 = arith.constant 0 : index
    %c0_25 = arith.constant 0 : index
    %33 = vector.load %arg9[%c0_24, %c0_25] : memref<128x128xbf16, #tpu.memory_space<vmem>>, vector<128x128xbf16>
    %cst_26 = arith.constant dense<0.000000e+00> : vector<8x128xf32>
    %34 = tpu.matmul %32, %33, %cst_26 {dimension_numbers = #tpu.dot_dimension_numbers<[1], [0], [0], [1], [0, 0, 1, 1], [], []>} : vector<8x128xbf16>, vector<128x128xbf16>, vector<8x128xf32> -> vector<8x128xf32>
    %c0_27 = arith.constant 0 : index
    %c0_28 = arith.constant 0 : index
    %35 = vector.load %arg10[%c0_27, %c0_28] : memref<1x128xf32, #tpu.memory_space<vmem>>, vector<1x128xf32>
    %36 = vector.broadcast %35 : vector<1x128xf32> to vector<8x128xf32>
    %37 = arith.addf %34, %36 : vector<8x128xf32>
    %38 = vector.shape_cast %37 : vector<8x128xf32> to vector<1x8x128xf32>
    %c0_29 = arith.constant 0 : index
    %c0_30 = arith.constant 0 : index
    %c0_31 = arith.constant 0 : index
    %39 = vector.load %arg11[%c0_29, %c0_30, %c0_31] : memref<1x8x128xf32, #tpu.memory_space<vmem>>, vector<1x8x128xf32>
    tpu.vector_store %arg11[%c0_29, %c0_30, %c0_31], %38 {strides = array<i32>} : memref<1x8x128xf32, #tpu.memory_space<vmem>>, vector<1x8x128xf32>,
    return
  }
  func.func @transform_0(%arg0: i32) -> (i32, i32, i32) {
    %c0_i32 = arith.constant 0 : i32
    %c0_i32_0 = arith.constant 0 : i32
    %c0_i32_1 = arith.constant 0 : i32
    return %arg0, %c0_i32, %c0_i32_0 : i32, i32, i32
  }
  func.func @transform_1(%arg0: i32) -> (i32, i32, i32) {
    %c0_i32 = arith.constant 0 : i32
    %c0_i32_0 = arith.constant 0 : i32
    %c0_i32_1 = arith.constant 0 : i32
    return %arg0, %c0_i32, %c0_i32_0 : i32, i32, i32
  }
  func.func @transform_2(%arg0: i32) -> (i32, i32) {
    %c0_i32 = arith.constant 0 : i32
    %c0_i32_0 = arith.constant 0 : i32
    %c0_i32_1 = arith.constant 0 : i32
    return %c0_i32, %c0_i32_0 : i32, i32
  }
  func.func @transform_3(%arg0: i32) -> (i32, i32) {
    %c0_i32 = arith.constant 0 : i32
    %c0_i32_0 = arith.constant 0 : i32
    %c0_i32_1 = arith.constant 0 : i32
    return %c0_i32, %c0_i32_0 : i32, i32
  }
  func.func @transform_4(%arg0: i32) -> (i32, i32) {
    %c0_i32 = arith.constant 0 : i32
    %c0_i32_0 = arith.constant 0 : i32
    %c0_i32_1 = arith.constant 0 : i32
    return %c0_i32, %c0_i32_0 : i32, i32
  }
  func.func @transform_5(%arg0: i32) -> (i32, i32) {
    %c0_i32 = arith.constant 0 : i32
    %c0_i32_0 = arith.constant 0 : i32
    %c0_i32_1 = arith.constant 0 : i32
    return %c0_i32, %c0_i32_0 : i32, i32
  }
  func.func @transform_6(%arg0: i32) -> (i32, i32) {
    %c0_i32 = arith.constant 0 : i32
    %c0_i32_0 = arith.constant 0 : i32
    %c0_i32_1 = arith.constant 0 : i32
    return %c0_i32, %c0_i32_0 : i32, i32
  }
  func.func @transform_7(%arg0: i32) -> (i32, i32) {
    %c0_i32 = arith.constant 0 : i32
    %c0_i32_0 = arith.constant 0 : i32
    %c0_i32_1 = arith.constant 0 : i32
    return %c0_i32, %c0_i32_0 : i32, i32
  }
  func.func @transform_8(%arg0: i32) -> (i32, i32) {
    %c0_i32 = arith.constant 0 : i32
    %c0_i32_0 = arith.constant 0 : i32
    %c0_i32_1 = arith.constant 0 : i32
    return %c0_i32, %c0_i32_0 : i32, i32
  }
  func.func @transform_9(%arg0: i32) -> (i32, i32) {
    %c0_i32 = arith.constant 0 : i32
    %c0_i32_0 = arith.constant 0 : i32
    %c0_i32_1 = arith.constant 0 : i32
    return %c0_i32, %c0_i32_0 : i32, i32
  }
  func.func @transform_10(%arg0: i32) -> (i32, i32, i32) {
    %c0_i32 = arith.constant 0 : i32
    %c0_i32_0 = arith.constant 0 : i32
    %c0_i32_1 = arith.constant 0 : i32
    return %arg0, %c0_i32, %c0_i32_0 : i32, i32, i32
  }
}

</mosaic_0001>

<llo_original>
// kernel: tpu_custom_call.1
$region0: #{tpu_custom_call.1}
  #allocation0 [shape = 'u32[]', space=smem, size = 0x4, offset = 0x4, fixed_abs, tag = 'smem constant byte address 0x4 - core index']
  #allocation1 [shape = 'u32[144,128]{1,0:T(1,128)}', space=vmem, size = 0x12000, scoped, tag = 'internal scratch']
  %s0 = inlined_call_operand.hbm [shape: bf16[2,8,128], index: 0, kind: input, shape index: {}]
  %s1 = inlined_call_operand.hbm [shape: bf16[2,8,8], index: 1, kind: input, shape index: {}]
  %s2 = inlined_call_operand.hbm [shape: bf16[128,128], index: 2, kind: input, shape index: {}]
  %s3 = inlined_call_operand.vmem [shape: f32[1,128], index: 3, kind: input, shape index: {}]
  %s4 = inlined_call_operand.hbm [shape: bf16[128,128], index: 4, kind: input, shape index: {}]
  %s5 = inlined_call_operand.vmem [shape: f32[1,128], index: 5, kind: input, shape index: {}]
  %s6 = inlined_call_operand.hbm [shape: bf16[128,128], index: 6, kind: input, shape index: {}]
  %s7 = inlined_call_operand.vmem [shape: f32[1,128], index: 7, kind: input, shape index: {}]
  %s8 = inlined_call_operand.hbm [shape: bf16[128,128], index: 8, kind: input, shape index: {}]
  %s9 = inlined_call_operand.vmem [shape: f32[1,128], index: 9, kind: input, shape index: {}]
  %s10 = inlined_call_operand.hbm [shape: f32[2,8,128], index: 10, kind: output, shape index: {}]
  %s11 = sld [smem:[#allocation0]]
  $region97: #{tpu_custom_call.1} parent=0
    _
  %s13 = ssub.s32 1, %s11
  %s14 = scalar_select 0, %s13, %s11
  $region1: #{tpu_custom_call.1} parent=0
    #allocation2 [shape = 'u8[4096]{0}', space=vmem, size = 0x1000, scoped, tag = 'input window, operand 0']
    #allocation3 [shape = 's32[2]{0}', space=sflag, size = 0x8, scoped, tag = 'scoped memory for tpu_custom_call.1']
    #allocation4 [shape = 's32[2]{0}', space=sflag, size = 0x8, scoped, tag = 'scoped memory for tpu_custom_call.1']
    #allocation5 [shape = 'u8[4096]{0}', space=vmem, size = 0x1000, scoped, tag = 'input window, operand 1']
    #allocation6 [shape = 's32[2]{0}', space=sflag, size = 0x8, scoped, tag = 'scoped memory for tpu_custom_call.1']
    #allocation7 [shape = 'u8[32768]{0}', space=vmem, size = 0x8000, scoped, tag = 'input window, operand 2, single buffered']
    #allocation8 [shape = 'u8[32768]{0}', space=vmem, size = 0x8000, scoped, tag = 'input window, operand 4, single buffered']
    #allocation9 [shape = 's32[1]{0}', space=sflag, size = 0x4, scoped, tag = 'scoped memory for tpu_custom_call.1']
    #allocation10 [shape = 'u8[32768]{0}', space=vmem, size = 0x8000, scoped, tag = 'input window, operand 6, single buffered']
    #allocation11 [shape = 'u8[32768]{0}', space=vmem, size = 0x8000, scoped, tag = 'input window, operand 8, single buffered']
    #allocation12 [shape = 's32[1]{0}', space=sflag, size = 0x4, scoped, tag = 'scoped memory for tpu_custom_call.1']
    #allocation13 [shape = 'u8[8192]{0}', space=vmem, size = 0x2000, scoped, tag = 'output window, operand 0']
    %15 = vsyncpa [#allocation3], 0
    %s16 = scalar_lea.sflag [#allocation3], 1
    %17 = vsyncpa %s16, 0
    %18 = vsyncpa [#allocation6], 0
    %s19 = scalar_lea.sflag [#allocation6], 1
    %20 = vsyncpa %s19, 0
    %21 = vsyncpa [#allocation9], 0
    %22 = vsyncpa [#allocation12], 0
    %23 = vsyncpa [#allocation4], 0
    %s24 = scalar_lea.sflag [#allocation4], 1
    %25 = vsyncpa %s24, 0
    loop: start=0, step=1, limit=4
    $region2: #{tpu_custom_call.1} parent=1 // loop_pre_header
      _
    $region3: #{tpu_custom_call.1} parent=1 // loop_header
      %s27 = sphi 0, %s31
      %p28 = scmp.ge.s32.totalorder %s27, 4
      %s37 = sphi 0, %s39
      %s40 = sphi 0, %s37
      %s41 = sphi 0, %s40
      %s57 = sphi 0, %s41
      %s63 = sphi 0, %s65
      %s66 = sphi 0, %s63
      %s67 = sphi 0, %s66
      %s83 = sphi 0, %s67
      %s87 = sphi 0, %s87
      %s89 = sphi 0, %s87
      %s90 = sphi 0, %s89
      %s104 = sphi 0, %s90
      %s108 = sphi 0, %s108
      %s110 = sphi 0, %s108
      %s111 = sphi 0, %s110
      %s125 = sphi 0, %s111
      %s129 = sphi 0, %s129
      %s131 = sphi 0, %s129
      %s132 = sphi 0, %s131
      %s146 = sphi 0, %s132
      %s150 = sphi 0, %s150
      %s152 = sphi 0, %s150
      %s153 = sphi 0, %s152
      %s167 = sphi 0, %s153
      %s171 = sphi 0, %s171
      %s173 = sphi 0, %s171
      %s174 = sphi 0, %s173
      %s188 = sphi 0, %s174
      %s192 = sphi 0, %s192
      %s194 = sphi 0, %s192
      %s195 = sphi 0, %s194
      %s209 = sphi 0, %s195
      %s213 = sphi 0, %s213
      %s215 = sphi 0, %s213
      %s216 = sphi 0, %s215
      %s230 = sphi 0, %s216
      %s234 = sphi 0, %s234
      %s236 = sphi 0, %s234
      %s237 = sphi 0, %s236
      %s251 = sphi 0, %s237
      %s257 = sphi 0, %s259
      %s260 = sphi 0, %s257
      %s261 = sphi 0, %s260
      %s277 = sphi 0, %s261
    $region4: #{tpu_custom_call.1} parent=1 // loop_header_branch
      %30 = sbr.rel (%p28) target = $region8
    $region5: #{tpu_custom_call.1} parent=1 // loop_body
      %s32 = ssub.s32 %s27, 1
      %s33 = ssub.s32 %s27, 2
      %s34 = sadd.s32 %s27, 1
      %s35 = ssub.s32 %s27, %s34
      %p36 = scmp.eq.s32.totalorder %s35, 0
      %s38 = sadd.s32 %s37, 1
      %s39 = scalar_select %p36, %s37, %s38
      %p42 = pneg %p36
      %p43 = scmp.eq.s32.totalorder %s27, 1
      %p44 = por %p42, %p43
      %p45 = scmp.ne.s32.totalorder %s37, %s40
      %p46 = scmp.eq.s32.totalorder %s27, 0
      %p47 = por %p45, %p46
      %p48 = scmp.ne.s32.totalorder %s37, %s40
      %p49 = scmp.eq.s32.totalorder %s32, 1
      %p50 = por %p48, %p49
      %p51 = scmp.ne.s32.totalorder %s40, %s41
      %p52 = scmp.eq.s32.totalorder %s32, 0
      %p53 = por %p51, %p52
      %p54 = scmp.ne.s32.totalorder %s40, %s41
      %p55 = scmp.eq.s32.totalorder %s33, 1
      %p56 = por %p54, %p55
      %p58 = scmp.ne.s32.totalorder %s41, %s57
      %p59 = scmp.eq.s32.totalorder %s33, 0
      %p60 = por %p58, %p59
      %s61 = ssub.s32 %s27, %s34
      %p62 = scmp.eq.s32.totalorder %s61, 0
      %s64 = sadd.s32 %s63, 1
      %s65 = scalar_select %p62, %s63, %s64
      %p68 = pneg %p62
      %p69 = scmp.eq.s32.totalorder %s27, 1
      %p70 = por %p68, %p69
      %p71 = scmp.ne.s32.totalorder %s63, %s66
      %p72 = scmp.eq.s32.totalorder %s27, 0
      %p73 = por %p71, %p72
      %p74 = scmp.ne.s32.totalorder %s63, %s66
      %p75 = scmp.eq.s32.totalorder %s32, 1
      %p76 = por %p74, %p75
      %p77 = scmp.ne.s32.totalorder %s66, %s67
      %p78 = scmp.eq.s32.totalorder %s32, 0
      %p79 = por %p77, %p78
      %p80 = scmp.ne.s32.totalorder %s66, %s67
      %p81 = scmp.eq.s32.totalorder %s33, 1
      %p82 = por %p80, %p81
      %p84 = scmp.ne.s32.totalorder %s67, %s83
      %p85 = scmp.eq.s32.totalorder %s33, 0
      %p86 = por %p84, %p85
      %s88 = sadd.s32 %s87, 1
      %p91 = scmp.eq.s32.totalorder %s27, 1
      %p92 = scmp.ne.s32.totalorder %s87, %s89
      %p93 = scmp.eq.s32.totalorder %s27, 0
      %p94 = por %p92, %p93
      %p95 = scmp.ne.s32.totalorder %s87, %s89
      %p96 = scmp.eq.s32.totalorder %s32, 1
      %p97 = por %p95, %p96
      %p98 = scmp.ne.s32.totalorder %s89, %s90
      %p99 = scmp.eq.s32.totalorder %s32, 0
      %p100 = por %p98, %p99
      %p101 = scmp.ne.s32.totalorder %s89, %s90
      %p102 = scmp.eq.s32.totalorder %s33, 1
      %p103 = por %p101, %p102
      %p105 = scmp.ne.s32.totalorder %s90, %s104
      %p106 = scmp.eq.s32.totalorder %s33, 0
      %p107 = por %p105, %p106
      %s109 = sadd.s32 %s108, 1
      %p112 = scmp.eq.s32.totalorder %s27, 1
      %p113 = scmp.ne.s32.totalorder %s108, %s110
      %p114 = scmp.eq.s32.totalorder %s27, 0
      %p115 = por %p113, %p114
      %p116 = scmp.ne.s32.totalorder %s108, %s110
      %p117 = scmp.eq.s32.totalorder %s32, 1
      %p118 = por %p116, %p117
      %p119 = scmp.ne.s32.totalorder %s110, %s111
      %p120 = scmp.eq.s32.totalorder %s32, 0
      %p121 = por %p119, %p120
      %p122 = scmp.ne.s32.totalorder %s110, %s111
      %p123 = scmp.eq.s32.totalorder %s33, 1
      %p124 = por %p122, %p123
      %p126 = scmp.ne.s32.totalorder %s111, %s125
      %p127 = scmp.eq.s32.totalorder %s33, 0
      %p128 = por %p126, %p127
      %s130 = sadd.s32 %s129, 1
      %p133 = scmp.eq.s32.totalorder %s27, 1
      %p134 = scmp.ne.s32.totalorder %s129, %s131
      %p135 = scmp.eq.s32.totalorder %s27, 0
      %p136 = por %p134, %p135
      %p137 = scmp.ne.s32.totalorder %s129, %s131
      %p138 = scmp.eq.s32.totalorder %s32, 1
      %p139 = por %p137, %p138
      %p140 = scmp.ne.s32.totalorder %s131, %s132
      %p141 = scmp.eq.s32.totalorder %s32, 0
      %p142 = por %p140, %p141
      %p143 = scmp.ne.s32.totalorder %s131, %s132
      %p144 = scmp.eq.s32.totalorder %s33, 1
      %p145 = por %p143, %p144
      %p147 = scmp.ne.s32.totalorder %s132, %s146
      %p148 = scmp.eq.s32.totalorder %s33, 0
      %p149 = por %p147, %p148
      %s151 = sadd.s32 %s150, 1
      %p154 = scmp.eq.s32.totalorder %s27, 1
      %p155 = scmp.ne.s32.totalorder %s150, %s152
      %p156 = scmp.eq.s32.totalorder %s27, 0
      %p157 = por %p155, %p156
      %p158 = scmp.ne.s32.totalorder %s150, %s152
      %p159 = scmp.eq.s32.totalorder %s32, 1
      %p160 = por %p158, %p159
      %p161 = scmp.ne.s32.totalorder %s152, %s153
      %p162 = scmp.eq.s32.totalorder %s32, 0
      %p163 = por %p161, %p162
      %p164 = scmp.ne.s32.totalorder %s152, %s153
      %p165 = scmp.eq.s32.totalorder %s33, 1
      %p166 = por %p164, %p165
      %p168 = scmp.ne.s32.totalorder %s153, %s167
      %p169 = scmp.eq.s32.totalorder %s33, 0
      %p170 = por %p168, %p169
      %s172 = sadd.s32 %s171, 1
      %p175 = scmp.eq.s32.totalorder %s27, 1
      %p176 = scmp.ne.s32.totalorder %s171, %s173
      %p177 = scmp.eq.s32.totalorder %s27, 0
      %p178 = por %p176, %p177
      %p179 = scmp.ne.s32.totalorder %s171, %s173
      %p180 = scmp.eq.s32.totalorder %s32, 1
      %p181 = por %p179, %p180
      %p182 = scmp.ne.s32.totalorder %s173, %s174
      %p183 = scmp.eq.s32.totalorder %s32, 0
      %p184 = por %p182, %p183
      %p185 = scmp.ne.s32.totalorder %s173, %s174
      %p186 = scmp.eq.s32.totalorder %s33, 1
      %p187 = por %p185, %p186
      %p189 = scmp.ne.s32.totalorder %s174, %s188
      %p190 = scmp.eq.s32.totalorder %s33, 0
      %p191 = por %p189, %p190
      %s193 = sadd.s32 %s192, 1
      %p196 = scmp.eq.s32.totalorder %s27, 1
      %p197 = scmp.ne.s32.totalorder %s192, %s194
      %p198 = scmp.eq.s32.totalorder %s27, 0
      %p199 = por %p197, %p198
      %p200 = scmp.ne.s32.totalorder %s192, %s194
      %p201 = scmp.eq.s32.totalorder %s32, 1
      %p202 = por %p200, %p201
      %p203 = scmp.ne.s32.totalorder %s194, %s195
      %p204 = scmp.eq.s32.totalorder %s32, 0
      %p205 = por %p203, %p204
      %p206 = scmp.ne.s32.totalorder %s194, %s195
      %p207 = scmp.eq.s32.totalorder %s33, 1
      %p208 = por %p206, %p207
      %p210 = scmp.ne.s32.totalorder %s195, %s209
      %p211 = scmp.eq.s32.totalorder %s33, 0
      %p212 = por %p210, %p211
      %s214 = sadd.s32 %s213, 1
      %p217 = scmp.eq.s32.totalorder %s27, 1
      %p218 = scmp.ne.s32.totalorder %s213, %s215
      %p219 = scmp.eq.s32.totalorder %s27, 0
      %p220 = por %p218, %p219
      %p221 = scmp.ne.s32.totalorder %s213, %s215
      %p222 = scmp.eq.s32.totalorder %s32, 1
      %p223 = por %p221, %p222
      %p224 = scmp.ne.s32.totalorder %s215, %s216
      %p225 = scmp.eq.s32.totalorder %s32, 0
      %p226 = por %p224, %p225
      %p227 = scmp.ne.s32.totalorder %s215, %s216
      %p228 = scmp.eq.s32.totalorder %s33, 1
      %p229 = por %p227, %p228
      %p231 = scmp.ne.s32.totalorder %s216, %s230
      %p232 = scmp.eq.s32.totalorder %s33, 0
      %p233 = por %p231, %p232
      %s235 = sadd.s32 %s234, 1
      %p238 = scmp.eq.s32.totalorder %s27, 1
      %p239 = scmp.ne.s32.totalorder %s234, %s236
      %p240 = scmp.eq.s32.totalorder %s27, 0
      %p241 = por %p239, %p240
      %p242 = scmp.ne.s32.totalorder %s234, %s236
      %p243 = scmp.eq.s32.totalorder %s32, 1
      %p244 = por %p242, %p243
      %p245 = scmp.ne.s32.totalorder %s236, %s237
      %p246 = scmp.eq.s32.totalorder %s32, 0
      %p247 = por %p245, %p246
      %p248 = scmp.ne.s32.totalorder %s236, %s237
      %p249 = scmp.eq.s32.totalorder %s33, 1
      %p250 = por %p248, %p249
      %p252 = scmp.ne.s32.totalorder %s237, %s251
      %p253 = scmp.eq.s32.totalorder %s33, 0
      %p254 = por %p252, %p253
      %s255 = ssub.s32 %s27, %s34
      %p256 = scmp.eq.s32.totalorder %s255, 0
      %s258 = sadd.s32 %s257, 1
      %s259 = scalar_select %p256, %s257, %s258
      %p262 = pneg %p256
      %p263 = scmp.eq.s32.totalorder %s27, 1
      %p264 = por %p262, %p263
      %p265 = scmp.ne.s32.totalorder %s257, %s260
      %p266 = scmp.eq.s32.totalorder %s27, 0
      %p267 = por %p265, %p266
      %p268 = scmp.ne.s32.totalorder %s257, %s260
      %p269 = scmp.eq.s32.totalorder %s32, 1
      %p270 = por %p268, %p269
      %p271 = scmp.ne.s32.totalorder %s260, %s261
      %p272 = scmp.eq.s32.totalorder %s32, 0
      %p273 = por %p271, %p272
      %p274 = scmp.ne.s32.totalorder %s260, %s261
      %p275 = scmp.eq.s32.totalorder %s33, 1
      %p276 = por %p274, %p275
      %p278 = scmp.ne.s32.totalorder %s261, %s277
      %p279 = scmp.eq.s32.totalorder %s33, 0
      %p280 = por %p278, %p279
      %p281 = scmp.le.s32.totalorder 1, %s27
      %p282 = scmp.lt.s32.totalorder %s27, 3
      %p283 = pnand %p281, %p282
      %p284 = pneg %p283
      // Predicated region
      $region9: #{tpu_custom_call.1} parent=5 // pred_check
        _
      $region10: #{tpu_custom_call.1} parent=5 // pred_check_branch
        %286 = sbr.rel (%p283) target = $region12
      $region11: #{tpu_custom_call.1} parent=5 // pred_region
        %s287 = ssub.s32 %s27, 1
        // Predicated region
        $region13: #{tpu_custom_call.1} parent=11 // pred_check
          %p288 = pneg %p100
        $region14: #{tpu_custom_call.1} parent=11 // pred_check_branch
          %290 = sbr.rel (%p288) target = $region16
        $region15: #{tpu_custom_call.1} parent=11 // pred_region
          %s292 = ssub.s32 1024, 1024
          %293 = vsyncadd [#allocation6], %s292
          %s294 = sshll.u32 [#allocation7], 4
          %s295 = int_to_ptr.vmem [resolvable:$true] %s294
          %300 = dma.hbm_to_vmem [thread:$0]  %s2, 1024, %s295, [#allocation6], 64, 64, 4
        $region16: #{tpu_custom_call.1} parent=11 // pred_fallthru
          _
        // Predicated region
        $region17: #{tpu_custom_call.1} parent=11 // pred_check
          %p301 = pneg %p121
        $region18: #{tpu_custom_call.1} parent=11 // pred_check_branch
          %303 = sbr.rel (%p301) target = $region20
        $region19: #{tpu_custom_call.1} parent=11 // pred_region
          _
        $region20: #{tpu_custom_call.1} parent=11 // pred_fallthru
          _
        // Predicated region
        $region21: #{tpu_custom_call.1} parent=11 // pred_check
          %p304 = pneg %p142
        $region22: #{tpu_custom_call.1} parent=11 // pred_check_branch
          %306 = sbr.rel (%p304) target = $region24
        $region23: #{tpu_custom_call.1} parent=11 // pred_region
          %s308 = ssub.s32 1024, 1024
          %309 = vsyncadd [#allocation9], %s308
          %s310 = sshll.u32 [#allocation8], 4
          %s311 = int_to_ptr.vmem [resolvable:$true] %s310
          %316 = dma.hbm_to_vmem [thread:$0]  %s4, 1024, %s311, [#allocation9], 64, 64, 4
        $region24: #{tpu_custom_call.1} parent=11 // pred_fallthru
          _
        // Predicated region
        $region25: #{tpu_custom_call.1} parent=11 // pred_check
          %p317 = pneg %p163
        $region26: #{tpu_custom_call.1} parent=11 // pred_check_branch
          %319 = sbr.rel (%p317) target = $region28
        $region27: #{tpu_custom_call.1} parent=11 // pred_region
          _
        $region28: #{tpu_custom_call.1} parent=11 // pred_fallthru
          _
        // Predicated region
        $region29: #{tpu_custom_call.1} parent=11 // pred_check
          %p320 = pneg %p184
        $region30: #{tpu_custom_call.1} parent=11 // pred_check_branch
          %322 = sbr.rel (%p320) target = $region32
        $region31: #{tpu_custom_call.1} parent=11 // pred_region
          %s324 = ssub.s32 1024, 1024
          %325 = vsyncadd [#allocation9], %s324
          %s326 = sshll.u32 [#allocation10], 4
          %s327 = int_to_ptr.vmem [resolvable:$true] %s326
          %332 = dma.hbm_to_vmem [thread:$0]  %s6, 1024, %s327, [#allocation9], 64, 64, 4
        $region32: #{tpu_custom_call.1} parent=11 // pred_fallthru
          _
        // Predicated region
        $region33: #{tpu_custom_call.1} parent=11 // pred_check
          %p333 = pneg %p205
        $region34: #{tpu_custom_call.1} parent=11 // pred_check_branch
          %335 = sbr.rel (%p333) target = $region36
        $region35: #{tpu_custom_call.1} parent=11 // pred_region
          _
        $region36: #{tpu_custom_call.1} parent=11 // pred_fallthru
          _
        // Predicated region
        $region37: #{tpu_custom_call.1} parent=11 // pred_check
          %p336 = pneg %p226
        $region38: #{tpu_custom_call.1} parent=11 // pred_check_branch
          %338 = sbr.rel (%p336) target = $region40
        $region39: #{tpu_custom_call.1} parent=11 // pred_region
          %s340 = ssub.s32 1024, 1024
          %341 = vsyncadd [#allocation12], %s340
          %s342 = sshll.u32 [#allocation11], 4
          %s343 = int_to_ptr.vmem [resolvable:$true] %s342
          %348 = dma.hbm_to_vmem [thread:$0]  %s8, 1024, %s343, [#allocation12], 64, 64, 4
        $region40: #{tpu_custom_call.1} parent=11 // pred_fallthru
          _
        // Predicated region
        $region41: #{tpu_custom_call.1} parent=11 // pred_check
          %p349 = pneg %p247
        $region42: #{tpu_custom_call.1} parent=11 // pred_check_branch
          %351 = sbr.rel (%p349) target = $region44
        $region43: #{tpu_custom_call.1} parent=11 // pred_region
          _
        $region44: #{tpu_custom_call.1} parent=11 // pred_fallthru
          _
      $region12: #{tpu_custom_call.1} parent=5 // pred_fallthru
        _
      %p352 = scmp.lt.s32.totalorder %s27, 2
      // Predicated region
      $region45: #{tpu_custom_call.1} parent=5 // pred_check
        %p353 = pneg %p352
      $region46: #{tpu_custom_call.1} parent=5 // pred_check_branch
        %355 = sbr.rel (%p353) target = $region48
      $region47: #{tpu_custom_call.1} parent=5 // pred_region
        // Predicated region
        $region49: #{tpu_custom_call.1} parent=47 // pred_check
          %p356 = pneg %p47
        $region50: #{tpu_custom_call.1} parent=47 // pred_check_branch
          %358 = sbr.rel (%p356) target = $region52
        $region51: #{tpu_custom_call.1} parent=47 // pred_region
          %s359 = sand.u32 %s37, 1
          %s360 = scalar_lea.sflag [#allocation3], %s359
          %s361 = sand.u32 %s37, 1
          %s362 = smul.addr %s361, 4
          %s363 = scalar_lea.vmem [#allocation2], %s362
          %s365 = ssub.s32 64, 64
          %366 = vsyncadd %s360, %s365
          %s367 = smul.addr %s27, 64
          %s368 = scalar_lea.hbm %s0, %s367
          %s370 = sshll.u32 %s363, 4
          %s371 = int_to_ptr.vmem [resolvable:$true] %s370
          %373 = dma.hbm_to_vmem [thread:$0]  %s368, 64, %s371, %s360
        $region52: #{tpu_custom_call.1} parent=47 // pred_fallthru
          _
        // Predicated region
        $region53: #{tpu_custom_call.1} parent=47 // pred_check
          %p374 = pneg %p73
        $region54: #{tpu_custom_call.1} parent=47 // pred_check_branch
          %376 = sbr.rel (%p374) target = $region56
        $region55: #{tpu_custom_call.1} parent=47 // pred_region
          %s377 = sand.u32 %s27, 1
          %s378 = scalar_lea.sflag [#allocation6], %s377
          %s379 = sand.u32 %s63, 1
          %s380 = smul.addr %s379, 4
          %s381 = scalar_lea.vmem [#allocation5], %s380
          %s383 = ssub.s32 64, 64
          %384 = vsyncadd %s378, %s383
          %s385 = smul.addr %s27, 64
          %s386 = scalar_lea.hbm %s1, %s385
          %s388 = sshll.u32 %s381, 4
          %s389 = int_to_ptr.vmem [resolvable:$true] %s388
          %391 = dma.hbm_to_vmem [thread:$0]  %s386, 64, %s389, %s378
        $region56: #{tpu_custom_call.1} parent=47 // pred_fallthru
          _
      $region48: #{tpu_custom_call.1} parent=5 // pred_fallthru
        _
      %p392 = scmp.le.s32.totalorder 1, %s27
      %p393 = scmp.lt.s32.totalorder %s27, 3
      %p394 = pnand %p392, %p393
      %p395 = pneg %p394
      // Predicated region
      $region57: #{tpu_custom_call.1} parent=5 // pred_check
        _
      $region58: #{tpu_custom_call.1} parent=5 // pred_check_branch
        %397 = sbr.rel (%p394) target = $region60
      $region59: #{tpu_custom_call.1} parent=5 // pred_region
        %s398 = ssub.s32 %s27, 1
        %s399 = sand.u32 %s40, 1
        %s400 = scalar_lea.sflag [#allocation3], %s399
        %s401 = sand.u32 %s40, 1
        %s402 = smul.addr %s401, 4
        %s403 = scalar_lea.vmem [#allocation2], %s402
        // Predicated region
        $region61: #{tpu_custom_call.1} parent=59 // pred_check
          %p404 = pneg %p53
        $region62: #{tpu_custom_call.1} parent=59 // pred_check_branch
          %406 = sbr.rel (%p404) target = $region64
        $region63: #{tpu_custom_call.1} parent=59 // pred_region
          %407 = dma.done %s400, 64
        $region64: #{tpu_custom_call.1} parent=59 // pred_fallthru
          _
        %s408 = sand.u32 %s32, 1
        %s409 = scalar_lea.sflag [#allocation6], %s408
        %s410 = sand.u32 %s66, 1
        %s411 = smul.addr %s410, 4
        %s412 = scalar_lea.vmem [#allocation5], %s411
        // Predicated region
        $region65: #{tpu_custom_call.1} parent=59 // pred_check
          %p413 = pneg %p79
        $region66: #{tpu_custom_call.1} parent=59 // pred_check_branch
          %415 = sbr.rel (%p413) target = $region68
        $region67: #{tpu_custom_call.1} parent=59 // pred_region
          %416 = dma.done %s409, 64
        $region68: #{tpu_custom_call.1} parent=59 // pred_fallthru
          _
        // Predicated region
        $region69: #{tpu_custom_call.1} parent=59 // pred_check
          %p417 = pneg %p100
        $region70: #{tpu_custom_call.1} parent=59 // pred_check_branch
          %419 = sbr.rel (%p417) target = $region72
        $region71: #{tpu_custom_call.1} parent=59 // pred_region
          %420 = dma.done [#allocation6], 1024
        $region72: #{tpu_custom_call.1} parent=59 // pred_fallthru
          _
        // Predicated region
        $region73: #{tpu_custom_call.1} parent=59 // pred_check
          %p421 = pneg %p142
        $region74: #{tpu_custom_call.1} parent=59 // pred_check_branch
          %423 = sbr.rel (%p421) target = $region76
        $region75: #{tpu_custom_call.1} parent=59 // pred_region
          %424 = dma.done [#allocation9], 1024
        $region76: #{tpu_custom_call.1} parent=59 // pred_fallthru
          _
        // Predicated region
        $region77: #{tpu_custom_call.1} parent=59 // pred_check
          %p425 = pneg %p184
        $region78: #{tpu_custom_call.1} parent=59 // pred_check_branch
          %427 = sbr.rel (%p425) target = $region80
        $region79: #{tpu_custom_call.1} parent=59 // pred_region
          %428 = dma.done [#allocation9], 1024
        $region80: #{tpu_custom_call.1} parent=59 // pred_fallthru
          _
        // Predicated region
        $region81: #{tpu_custom_call.1} parent=59 // pred_check
          %p429 = pneg %p226
        $region82: #{tpu_custom_call.1} parent=59 // pred_check_branch
          %431 = sbr.rel (%p429) target = $region84
        $region83: #{tpu_custom_call.1} parent=59 // pred_region
          %432 = dma.done [#allocation12], 1024
        $region84: #{tpu_custom_call.1} parent=59 // pred_fallthru
          _
        %s433 = sand.u32 %s40, 1
        %s434 = scalar_lea.sflag [#allocation3], %s433
        %s435 = sand.u32 %s40, 1
        %s436 = smul.addr %s435, 4
        %s437 = scalar_lea.vmem [#allocation2], %s436
        %p438 = pneg %p53
        %p439 = pneg %p50
        %s440 = sand.u32 %s32, 1
        %s441 = scalar_lea.sflag [#allocation6], %s440
        %s442 = sand.u32 %s66, 1
        %s443 = smul.addr %s442, 4
        %s444 = scalar_lea.vmem [#allocation5], %s443
        %p445 = pneg %p79
        %p446 = pneg %p76
        %p447 = pneg %p100
        %p448 = pneg %p97
        %p449 = pneg %p121
        %p450 = pneg %p118
        %p451 = pneg %p142
        %p452 = pneg %p139
        %p453 = pneg %p163
        %p454 = pneg %p160
        %p455 = pneg %p184
        %p456 = pneg %p181
        %p457 = pneg %p205
        %p458 = pneg %p202
        %p459 = pneg %p226
        %p460 = pneg %p223
        %p461 = pneg %p247
        %p462 = pneg %p244
        %p463 = pneg %p273
        %p464 = pneg %p270
        %s465 = sand.u32 %s260, 1
        %s466 = scalar_lea.sflag [#allocation4], %s465
        %s467 = sand.u32 %s260, 1
        %s468 = smul.addr %s467, 8
        %s469 = scalar_lea.vmem [#allocation13], %s468
        %v471 = vld [vmem:[%s412] sm:$0xf]
        %v472 = vld [vmem:[%s403] sm:$0xf]
        %vm473 = vcmask 64512
        %v475 = vsel %vm473, %v471, 0
        %vm477 = vcmask 1043456
        %v479 = vsel %vm477, %v472, 0
        %481 = vmatprep.subr.bf16.mxu0 0
        %482 = vmatpush1.bf16.msra.mxu0 %v479
        %483 = vmatprep.subr.bf16.mxu0 0
        %484 = vmatpush1.bf16.msra.mxu0 0
        %485 = vmatprep.subr.bf16.mxu0 0
        %486 = vmatpush1.bf16.msra.mxu0 0
        %487 = vmatprep.subr.bf16.mxu0 0
        %488 = vmatpush1.bf16.msra.mxu0 0
        %489 = vmatprep.subr.bf16.mxu0 0
        %490 = vmatpush1.bf16.msra.mxu0 0
        %491 = vmatprep.subr.bf16.mxu0 0
        %492 = vmatpush1.bf16.msra.mxu0 0
        %493 = vmatprep.subr.bf16.mxu0 0
        %494 = vmatpush1.bf16.msra.mxu0 0
        %495 = vmatprep.subr.bf16.mxu0 0
        %496 = vmatpush1.bf16.msra.mxu0 0
        %497 = vmatprep.subr.bf16.mxu0 0
        %498 = vmatpush1.bf16.msra.mxu0 0
        %499 = vmatprep.subr.bf16.mxu0 0
        %500 = vmatpush1.bf16.msra.mxu0 0
        %501 = vmatprep.subr.bf16.mxu0 0
        %502 = vmatpush1.bf16.msra.mxu0 0
        %503 = vmatprep.subr.bf16.mxu0 0
        %504 = vmatpush1.bf16.msra.mxu0 0
        %505 = vmatprep.subr.bf16.mxu0 0
        %506 = vmatpush1.bf16.msra.mxu0 0
        %507 = vmatprep.subr.bf16.mxu0 0
        %508 = vmatpush1.bf16.msra.mxu0 0
        %509 = vmatprep.subr.bf16.mxu0 0
        %510 = vmatpush1.bf16.msra.mxu0 0
        %511 = vmatprep.subr.bf16.mxu0 0
        %512 = vmatpush1.bf16.msra.mxu0 0
        %513 = vmatprep.mubr.bf16.mxu0 0
        %514 = vmatmul.mubr.bf16.gmra.mrb[0].mxu0 %v475
        %v515 = vpop.f32.mrb[0].mxu0
        %v516 = vadd.f32 0.0, %v515
        %v517 = vpop.f32.mrb[0].mxu0
        %v518 = vpop.f32.mrb[0].mxu0
        %v519 = vpop.f32.mrb[0].mxu0
        %520 = vdwg.mxu0
        %v521 = vpack.c.bf16 %v516, %v516
        %v522 = vld [vmem:[#allocation7] sm:$0xf]
        %v523 = vld [vmem:[#allocation7 + $0x4] sm:$0xf]
        %v524 = vld [vmem:[#allocation7 + $0x8] sm:$0xf]
        %v525 = vld [vmem:[#allocation7 + $0xc] sm:$0xf]
        %v526 = vld [vmem:[#allocation7 + $0x10] sm:$0xf]
        %v527 = vld [vmem:[#allocation7 + $0x14] sm:$0xf]
        %v528 = vld [vmem:[#allocation7 + $0x18] sm:$0xf]
        %v529 = vld [vmem:[#allocation7 + $0x1c] sm:$0xf]
        %v530 = vld [vmem:[#allocation7 + $0x20] sm:$0xf]
        %v531 = vld [vmem:[#allocation7 + $0x24] sm:$0xf]
        %v532 = vld [vmem:[#allocation7 + $0x28] sm:$0xf]
        %v533 = vld [vmem:[#allocation7 + $0x2c] sm:$0xf]
        %v534 = vld [vmem:[#allocation7 + $0x30] sm:$0xf]
        %v535 = vld [vmem:[#allocation7 + $0x34] sm:$0xf]
        %v536 = vld [vmem:[#allocation7 + $0x38] sm:$0xf]
        %v537 = vld [vmem:[#allocation7 + $0x3c] sm:$0xf]
        %v538 = vld [vmem:[%s3] sm:$0x1]
        %v540 = vlaneseq
        %v541 = vshrl.u32 %v540, 7
        %v542 = vsub.s32 0, %v541
        %v543 = vrot.slane %v538, %v542
        %v561 = vunpack.c.l.b16 %v522
        %v562 = vunpack.c.l.b16 %v523
        %v563 = vunpack.c.l.b16 %v524
        %v564 = vunpack.c.l.b16 %v525
        %v565 = vunpack.c.l.b16 %v526
        %v566 = vunpack.c.l.b16 %v527
        %v567 = vunpack.c.l.b16 %v528
        %v568 = vunpack.c.l.b16 %v529
        %v569 = vunpack.c.l.b16 %v530
        %v570 = vunpack.c.l.b16 %v531
        %v571 = vunpack.c.l.b16 %v532
        %v572 = vunpack.c.l.b16 %v533
        %v573 = vunpack.c.l.b16 %v534
        %v574 = vunpack.c.l.b16 %v535
        %v575 = vunpack.c.l.b16 %v536
        %v576 = vunpack.c.l.b16 %v537
        %v577 = vpack.c.b16 %v562, %v561
        %v578 = vpack.c.b16 %v564, %v563
        %v579 = vpack.c.b16 %v566, %v565
        %v580 = vpack.c.b16 %v568, %v567
        %v581 = vpack.c.b16 %v570, %v569
        %v582 = vpack.c.b16 %v572, %v571
        %v583 = vpack.c.b16 %v574, %v573
        %v584 = vpack.c.b16 %v576, %v575
        %593 = vmatprep.subr.bf16.mxu0 0
        %594 = vmatpush1.bf16.msra.mxu0 %v577
        %595 = vmatprep.subr.bf16.mxu0 0
        %596 = vmatpush1.bf16.msra.mxu0 %v578
        %597 = vmatprep.subr.bf16.mxu0 0
        %598 = vmatpush1.bf16.msra.mxu0 %v579
        %599 = vmatprep.subr.bf16.mxu0 0
        %600 = vmatpush1.bf16.msra.mxu0 %v580
        %601 = vmatprep.subr.bf16.mxu0 0
        %602 = vmatpush1.bf16.msra.mxu0 %v581
        %603 = vmatprep.subr.bf16.mxu0 0
        %604 = vmatpush1.bf16.msra.mxu0 %v582
        %605 = vmatprep.subr.bf16.mxu0 0
        %606 = vmatpush1.bf16.msra.mxu0 %v583
        %607 = vmatprep.subr.bf16.mxu0 0
        %608 = vmatpush1.bf16.msra.mxu0 %v584
        %609 = vmatprep.subr.bf16.mxu0 0
        %610 = vmatpush1.bf16.msra.mxu0 0
        %611 = vmatprep.subr.bf16.mxu0 0
        %612 = vmatpush1.bf16.msra.mxu0 0
        %613 = vmatprep.subr.bf16.mxu0 0
        %614 = vmatpush1.bf16.msra.mxu0 0
        %615 = vmatprep.subr.bf16.mxu0 0
        %616 = vmatpush1.bf16.msra.mxu0 0
        %617 = vmatprep.subr.bf16.mxu0 0
        %618 = vmatpush1.bf16.msra.mxu0 0
        %619 = vmatprep.subr.bf16.mxu0 0
        %620 = vmatpush1.bf16.msra.mxu0 0
        %621 = vmatprep.subr.bf16.mxu0 0
        %622 = vmatpush1.bf16.msra.mxu0 0
        %623 = vmatprep.subr.bf16.mxu0 0
        %624 = vmatpush1.bf16.msra.mxu0 0
        %625 = vmatprep.mubr.bf16.mxu0 0
        %626 = vmatmul.mubr.bf16.gmra.mrb[0].mxu0 %v521
        %v627 = vpop.f32.mrb[0].mxu0
        %v628 = vadd.f32 %v543, %v627
        %v629 = vpop.f32.mrb[0].mxu0
        %v630 = vpop.f32.mrb[0].mxu0
        %v631 = vpop.f32.mrb[0].mxu0
        %632 = vdwg.mxu0
        %v633 = vmax.f32 %v628, 0.0
        %v634 = vpack.c.bf16 %v633, %v633
        %v636 = vsel %vm477, %v634, 0
        %638 = vmatprep.subr.bf16.mxu0 0
        %639 = vmatpush1.bf16.msra.mxu0 %v636
        %640 = vmatprep.subr.bf16.mxu0 0
        %641 = vmatpush1.bf16.msra.mxu0 0
        %642 = vmatprep.subr.bf16.mxu0 0
        %643 = vmatpush1.bf16.msra.mxu0 0
        %644 = vmatprep.subr.bf16.mxu0 0
        %645 = vmatpush1.bf16.msra.mxu0 0
        %646 = vmatprep.subr.bf16.mxu0 0
        %647 = vmatpush1.bf16.msra.mxu0 0
        %648 = vmatprep.subr.bf16.mxu0 0
        %649 = vmatpush1.bf16.msra.mxu0 0
        %650 = vmatprep.subr.bf16.mxu0 0
        %651 = vmatpush1.bf16.msra.mxu0 0
        %652 = vmatprep.subr.bf16.mxu0 0
        %653 = vmatpush1.bf16.msra.mxu0 0
        %654 = vmatprep.subr.bf16.mxu0 0
        %655 = vmatpush1.bf16.msra.mxu0 0
        %656 = vmatprep.subr.bf16.mxu0 0
        %657 = vmatpush1.bf16.msra.mxu0 0
        %658 = vmatprep.subr.bf16.mxu0 0
        %659 = vmatpush1.bf16.msra.mxu0 0
        %660 = vmatprep.subr.bf16.mxu0 0
        %661 = vmatpush1.bf16.msra.mxu0 0
        %662 = vmatprep.subr.bf16.mxu0 0
        %663 = vmatpush1.bf16.msra.mxu0 0
        %664 = vmatprep.subr.bf16.mxu0 0
        %665 = vmatpush1.bf16.msra.mxu0 0
        %666 = vmatprep.subr.bf16.mxu0 0
        %667 = vmatpush1.bf16.msra.mxu0 0
        %668 = vmatprep.subr.bf16.mxu0 0
        %669 = vmatpush1.bf16.msra.mxu0 0
        %670 = vmatprep.mubr.bf16.mxu0 0
        %671 = vmatmul.mubr.bf16.gmra.mrb[0].mxu0 %v475
        %v672 = vpop.f32.mrb[0].mxu0
        %v673 = vadd.f32 0.0, %v672
        %v674 = vpop.f32.mrb[0].mxu0
        %v675 = vpop.f32.mrb[0].mxu0
        %v676 = vpop.f32.mrb[0].mxu0
        %677 = vdwg.mxu0
        %v678 = vpack.c.bf16 %v673, %v673
        %v679 = vld [vmem:[#allocation8] sm:$0xf]
        %v680 = vld [vmem:[#allocation8 + $0x4] sm:$0xf]
        %v681 = vld [vmem:[#allocation8 + $0x8] sm:$0xf]
        %v682 = vld [vmem:[#allocation8 + $0xc] sm:$0xf]
        %v683 = vld [vmem:[#allocation8 + $0x10] sm:$0xf]
        %v684 = vld [vmem:[#allocation8 + $0x14] sm:$0xf]
        %v685 = vld [vmem:[#allocation8 + $0x18] sm:$0xf]
        %v686 = vld [vmem:[#allocation8 + $0x1c] sm:$0xf]
        %v687 = vld [vmem:[#allocation8 + $0x20] sm:$0xf]
        %v688 = vld [vmem:[#allocation8 + $0x24] sm:$0xf]
        %v689 = vld [vmem:[#allocation8 + $0x28] sm:$0xf]
        %v690 = vld [vmem:[#allocation8 + $0x2c] sm:$0xf]
        %v691 = vld [vmem:[#allocation8 + $0x30] sm:$0xf]
        %v692 = vld [vmem:[#allocation8 + $0x34] sm:$0xf]
        %v693 = vld [vmem:[#allocation8 + $0x38] sm:$0xf]
        %v694 = vld [vmem:[#allocation8 + $0x3c] sm:$0xf]
        %v695 = vld [vmem:[%s5] sm:$0x1]
        %v697 = vlaneseq
        %v698 = vshrl.u32 %v697, 7
        %v699 = vsub.s32 0, %v698
        %v700 = vrot.slane %v695, %v699
        %v718 = vunpack.c.l.b16 %v679
        %v719 = vunpack.c.l.b16 %v680
        %v720 = vunpack.c.l.b16 %v681
        %v721 = vunpack.c.l.b16 %v682
        %v722 = vunpack.c.l.b16 %v683
        %v723 = vunpack.c.l.b16 %v684
        %v724 = vunpack.c.l.b16 %v685
        %v725 = vunpack.c.l.b16 %v686
        %v726 = vunpack.c.l.b16 %v687
        %v727 = vunpack.c.l.b16 %v688
        %v728 = vunpack.c.l.b16 %v689
        %v729 = vunpack.c.l.b16 %v690
        %v730 = vunpack.c.l.b16 %v691
        %v731 = vunpack.c.l.b16 %v692
        %v732 = vunpack.c.l.b16 %v693
        %v733 = vunpack.c.l.b16 %v694
        %v734 = vpack.c.b16 %v719, %v718
        %v735 = vpack.c.b16 %v721, %v720
        %v736 = vpack.c.b16 %v723, %v722
        %v737 = vpack.c.b16 %v725, %v724
        %v738 = vpack.c.b16 %v727, %v726
        %v739 = vpack.c.b16 %v729, %v728
        %v740 = vpack.c.b16 %v731, %v730
        %v741 = vpack.c.b16 %v733, %v732
        %750 = vmatprep.subr.bf16.mxu0 0
        %751 = vmatpush1.bf16.msra.mxu0 %v734
        %752 = vmatprep.subr.bf16.mxu0 0
        %753 = vmatpush1.bf16.msra.mxu0 %v735
        %754 = vmatprep.subr.bf16.mxu0 0
        %755 = vmatpush1.bf16.msra.mxu0 %v736
        %756 = vmatprep.subr.bf16.mxu0 0
        %757 = vmatpush1.bf16.msra.mxu0 %v737
        %758 = vmatprep.subr.bf16.mxu0 0
        %759 = vmatpush1.bf16.msra.mxu0 %v738
        %760 = vmatprep.subr.bf16.mxu0 0
        %761 = vmatpush1.bf16.msra.mxu0 %v739
        %762 = vmatprep.subr.bf16.mxu0 0
        %763 = vmatpush1.bf16.msra.mxu0 %v740
        %764 = vmatprep.subr.bf16.mxu0 0
        %765 = vmatpush1.bf16.msra.mxu0 %v741
        %766 = vmatprep.subr.bf16.mxu0 0
        %767 = vmatpush1.bf16.msra.mxu0 0
        %768 = vmatprep.subr.bf16.mxu0 0
        %769 = vmatpush1.bf16.msra.mxu0 0
        %770 = vmatprep.subr.bf16.mxu0 0
        %771 = vmatpush1.bf16.msra.mxu0 0
        %772 = vmatprep.subr.bf16.mxu0 0
        %773 = vmatpush1.bf16.msra.mxu0 0
        %774 = vmatprep.subr.bf16.mxu0 0
        %775 = vmatpush1.bf16.msra.mxu0 0
        %776 = vmatprep.subr.bf16.mxu0 0
        %777 = vmatpush1.bf16.msra.mxu0 0
        %778 = vmatprep.subr.bf16.mxu0 0
        %779 = vmatpush1.bf16.msra.mxu0 0
        %780 = vmatprep.subr.bf16.mxu0 0
        %781 = vmatpush1.bf16.msra.mxu0 0
        %782 = vmatprep.mubr.bf16.mxu0 0
        %783 = vmatmul.mubr.bf16.gmra.mrb[0].mxu0 %v678
        %v784 = vpop.f32.mrb[0].mxu0
        %v785 = vadd.f32 %v700, %v784
        %v786 = vpop.f32.mrb[0].mxu0
        %v787 = vpop.f32.mrb[0].mxu0
        %v788 = vpop.f32.mrb[0].mxu0
        %789 = vdwg.mxu0
        %v790 = vmax.f32 %v785, 0.0
        %v791 = vpack.c.bf16 %v790, %v790
        %v792 = vld [vmem:[#allocation10] sm:$0xf]
        %v793 = vld [vmem:[#allocation10 + $0x4] sm:$0xf]
        %v794 = vld [vmem:[#allocation10 + $0x8] sm:$0xf]
        %v795 = vld [vmem:[#allocation10 + $0xc] sm:$0xf]
        %v796 = vld [vmem:[#allocation10 + $0x10] sm:$0xf]
        %v797 = vld [vmem:[#allocation10 + $0x14] sm:$0xf]
        %v798 = vld [vmem:[#allocation10 + $0x18] sm:$0xf]
        %v799 = vld [vmem:[#allocation10 + $0x1c] sm:$0xf]
        %v800 = vld [vmem:[#allocation10 + $0x20] sm:$0xf]
        %v801 = vld [vmem:[#allocation10 + $0x24] sm:$0xf]
        %v802 = vld [vmem:[#allocation10 + $0x28] sm:$0xf]
        %v803 = vld [vmem:[#allocation10 + $0x2c] sm:$0xf]
        %v804 = vld [vmem:[#allocation10 + $0x30] sm:$0xf]
        %v805 = vld [vmem:[#allocation10 + $0x34] sm:$0xf]
        %v806 = vld [vmem:[#allocation10 + $0x38] sm:$0xf]
        %v807 = vld [vmem:[#allocation10 + $0x3c] sm:$0xf]
        %v808 = vld [vmem:[%s7] sm:$0x1]
        %v810 = vlaneseq
        %v811 = vshrl.u32 %v810, 7
        %v812 = vsub.s32 0, %v811
        %v813 = vrot.slane %v808, %v812
        %v831 = vunpack.c.l.b16 %v792
        %v832 = vunpack.c.l.b16 %v793
        %v833 = vunpack.c.l.b16 %v794
        %v834 = vunpack.c.l.b16 %v795
        %v835 = vunpack.c.l.b16 %v796
        %v836 = vunpack.c.l.b16 %v797
        %v837 = vunpack.c.l.b16 %v798
        %v838 = vunpack.c.l.b16 %v799
        %v839 = vunpack.c.l.b16 %v800
        %v840 = vunpack.c.l.b16 %v801
        %v841 = vunpack.c.l.b16 %v802
        %v842 = vunpack.c.l.b16 %v803
        %v843 = vunpack.c.l.b16 %v804
        %v844 = vunpack.c.l.b16 %v805
        %v845 = vunpack.c.l.b16 %v806
        %v846 = vunpack.c.l.b16 %v807
        %v847 = vpack.c.b16 %v832, %v831
        %v848 = vpack.c.b16 %v834, %v833
        %v849 = vpack.c.b16 %v836, %v835
        %v850 = vpack.c.b16 %v838, %v837
        %v851 = vpack.c.b16 %v840, %v839
        %v852 = vpack.c.b16 %v842, %v841
        %v853 = vpack.c.b16 %v844, %v843
        %v854 = vpack.c.b16 %v846, %v845
        %863 = vmatprep.subr.bf16.mxu0 0
        %864 = vmatpush1.bf16.msra.mxu0 %v847
        %865 = vmatprep.subr.bf16.mxu0 0
        %866 = vmatpush1.bf16.msra.mxu0 %v848
        %867 = vmatprep.subr.bf16.mxu0 0
        %868 = vmatpush1.bf16.msra.mxu0 %v849
        %869 = vmatprep.subr.bf16.mxu0 0
        %870 = vmatpush1.bf16.msra.mxu0 %v850
        %871 = vmatprep.subr.bf16.mxu0 0
        %872 = vmatpush1.bf16.msra.mxu0 %v851
        %873 = vmatprep.subr.bf16.mxu0 0
        %874 = vmatpush1.bf16.msra.mxu0 %v852
        %875 = vmatprep.subr.bf16.mxu0 0
        %876 = vmatpush1.bf16.msra.mxu0 %v853
        %877 = vmatprep.subr.bf16.mxu0 0
        %878 = vmatpush1.bf16.msra.mxu0 %v854
        %879 = vmatprep.subr.bf16.mxu0 0
        %880 = vmatpush1.bf16.msra.mxu0 0
        %881 = vmatprep.subr.bf16.mxu0 0
        %882 = vmatpush1.bf16.msra.mxu0 0
        %883 = vmatprep.subr.bf16.mxu0 0
        %884 = vmatpush1.bf16.msra.mxu0 0
        %885 = vmatprep.subr.bf16.mxu0 0
        %886 = vmatpush1.bf16.msra.mxu0 0
        %887 = vmatprep.subr.bf16.mxu0 0
        %888 = vmatpush1.bf16.msra.mxu0 0
        %889 = vmatprep.subr.bf16.mxu0 0
        %890 = vmatpush1.bf16.msra.mxu0 0
        %891 = vmatprep.subr.bf16.mxu0 0
        %892 = vmatpush1.bf16.msra.mxu0 0
        %893 = vmatprep.subr.bf16.mxu0 0
        %894 = vmatpush1.bf16.msra.mxu0 0
        %895 = vmatprep.mubr.bf16.mxu0 0
        %896 = vmatmul.mubr.bf16.gmra.mrb[0].mxu0 %v791
        %v897 = vpop.f32.mrb[0].mxu0
        %v898 = vadd.f32 %v813, %v897
        %v899 = vpop.f32.mrb[0].mxu0
        %v900 = vpop.f32.mrb[0].mxu0
        %v901 = vpop.f32.mrb[0].mxu0
        %902 = vdwg.mxu0
        %v903 = vmax.f32 %v898, 0.0
        %v904 = vpack.c.bf16 %v903, %v903
        %v905 = vld [vmem:[#allocation11] sm:$0xf]
        %v906 = vld [vmem:[#allocation11 + $0x4] sm:$0xf]
        %v907 = vld [vmem:[#allocation11 + $0x8] sm:$0xf]
        %v908 = vld [vmem:[#allocation11 + $0xc] sm:$0xf]
        %v909 = vld [vmem:[#allocation11 + $0x10] sm:$0xf]
        %v910 = vld [vmem:[#allocation11 + $0x14] sm:$0xf]
        %v911 = vld [vmem:[#allocation11 + $0x18] sm:$0xf]
        %v912 = vld [vmem:[#allocation11 + $0x1c] sm:$0xf]
        %v913 = vld [vmem:[#allocation11 + $0x20] sm:$0xf]
        %v914 = vld [vmem:[#allocation11 + $0x24] sm:$0xf]
        %v915 = vld [vmem:[#allocation11 + $0x28] sm:$0xf]
        %v916 = vld [vmem:[#allocation11 + $0x2c] sm:$0xf]
        %v917 = vld [vmem:[#allocation11 + $0x30] sm:$0xf]
        %v918 = vld [vmem:[#allocation11 + $0x34] sm:$0xf]
        %v919 = vld [vmem:[#allocation11 + $0x38] sm:$0xf]
        %v920 = vld [vmem:[#allocation11 + $0x3c] sm:$0xf]
        %v921 = vld [vmem:[%s9] sm:$0x1]
        %v923 = vlaneseq
        %v924 = vshrl.u32 %v923, 7
        %v925 = vsub.s32 0, %v924
        %v926 = vrot.slane %v921, %v925
        %v944 = vunpack.c.l.b16 %v905
        %v945 = vunpack.c.l.b16 %v906
        %v946 = vunpack.c.l.b16 %v907
        %v947 = vunpack.c.l.b16 %v908
        %v948 = vunpack.c.l.b16 %v909
        %v949 = vunpack.c.l.b16 %v910
        %v950 = vunpack.c.l.b16 %v911
        %v951 = vunpack.c.l.b16 %v912
        %v952 = vunpack.c.l.b16 %v913
        %v953 = vunpack.c.l.b16 %v914
        %v954 = vunpack.c.l.b16 %v915
        %v955 = vunpack.c.l.b16 %v916
        %v956 = vunpack.c.l.b16 %v917
        %v957 = vunpack.c.l.b16 %v918
        %v958 = vunpack.c.l.b16 %v919
        %v959 = vunpack.c.l.b16 %v920
        %v960 = vpack.c.b16 %v945, %v944
        %v961 = vpack.c.b16 %v947, %v946
        %v962 = vpack.c.b16 %v949, %v948
        %v963 = vpack.c.b16 %v951, %v950
        %v964 = vpack.c.b16 %v953, %v952
        %v965 = vpack.c.b16 %v955, %v954
        %v966 = vpack.c.b16 %v957, %v956
        %v967 = vpack.c.b16 %v959, %v958
        %976 = vmatprep.subr.bf16.mxu0 0
        %977 = vmatpush1.bf16.msra.mxu0 %v960
        %978 = vmatprep.subr.bf16.mxu0 0
        %979 = vmatpush1.bf16.msra.mxu0 %v961
        %980 = vmatprep.subr.bf16.mxu0 0
        %981 = vmatpush1.bf16.msra.mxu0 %v962
        %982 = vmatprep.subr.bf16.mxu0 0
        %983 = vmatpush1.bf16.msra.mxu0 %v963
        %984 = vmatprep.subr.bf16.mxu0 0
        %985 = vmatpush1.bf16.msra.mxu0 %v964
        %986 = vmatprep.subr.bf16.mxu0 0
        %987 = vmatpush1.bf16.msra.mxu0 %v965
        %988 = vmatprep.subr.bf16.mxu0 0
        %989 = vmatpush1.bf16.msra.mxu0 %v966
        %990 = vmatprep.subr.bf16.mxu0 0
        %991 = vmatpush1.bf16.msra.mxu0 %v967
        %992 = vmatprep.subr.bf16.mxu0 0
        %993 = vmatpush1.bf16.msra.mxu0 0
        %994 = vmatprep.subr.bf16.mxu0 0
        %995 = vmatpush1.bf16.msra.mxu0 0
        %996 = vmatprep.subr.bf16.mxu0 0
        %997 = vmatpush1.bf16.msra.mxu0 0
        %998 = vmatprep.subr.bf16.mxu0 0
        %999 = vmatpush1.bf16.msra.mxu0 0
        %1000 = vmatprep.subr.bf16.mxu0 0
        %1001 = vmatpush1.bf16.msra.mxu0 0
        %1002 = vmatprep.subr.bf16.mxu0 0
        %1003 = vmatpush1.bf16.msra.mxu0 0
        %1004 = vmatprep.subr.bf16.mxu0 0
        %1005 = vmatpush1.bf16.msra.mxu0 0
        %1006 = vmatprep.subr.bf16.mxu0 0
        %1007 = vmatpush1.bf16.msra.mxu0 0
        %1008 = vmatprep.mubr.bf16.mxu0 0
        %1009 = vmatmul.mubr.bf16.gmra.mrb[0].mxu0 %v904
        %v1010 = vpop.f32.mrb[0].mxu0
        %v1011 = vadd.f32 %v926, %v1010
        %v1012 = vpop.f32.mrb[0].mxu0
        %v1013 = vpop.f32.mrb[0].mxu0
        %v1014 = vpop.f32.mrb[0].mxu0
        %1015 = vdwg.mxu0
        %1016 = vst [vmem:[%s469] sm:$0xff] %v1011
        %s1017 = sand.u32 %s260, 1
        %s1018 = scalar_lea.sflag [#allocation4], %s1017
        %s1019 = sand.u32 %s260, 1
        %s1020 = smul.addr %s1019, 8
        %s1021 = scalar_lea.vmem [#allocation13], %s1020
        // Predicated region
        $region85: #{tpu_custom_call.1} parent=59 // pred_check
          %p1022 = pneg %p270
        $region86: #{tpu_custom_call.1} parent=59 // pred_check_branch
          %1024 = sbr.rel (%p1022) target = $region88
        $region87: #{tpu_custom_call.1} parent=59 // pred_region
          %s1026 = ssub.s32 128, 128
          %1027 = vsyncadd %s1018, %s1026
          %s1028 = smul.addr %s32, 128
          %s1029 = scalar_lea.hbm %s10, %s1028
          %s1031 = sshll.u32 %s1021, 4
          %s1032 = int_to_ptr.vmem [resolvable:$true] %s1031
          %1034 = dma.vmem_to_hbm [thread:$0]  %s1032, 128, %s1029, %s1018
        $region88: #{tpu_custom_call.1} parent=59 // pred_fallthru
          _
      $region60: #{tpu_custom_call.1} parent=5 // pred_fallthru
        _
      %p1035 = scmp.le.s32.totalorder 2, %s27
      // Predicated region
      $region89: #{tpu_custom_call.1} parent=5 // pred_check
        %p1036 = pneg %p1035
      $region90: #{tpu_custom_call.1} parent=5 // pred_check_branch
        %1038 = sbr.rel (%p1036) target = $region92
      $region91: #{tpu_custom_call.1} parent=5 // pred_region
        %s1039 = ssub.s32 %s27, 2
        // Predicated region
        $region93: #{tpu_custom_call.1} parent=91 // pred_check
          %p1040 = pneg %p276
        $region94: #{tpu_custom_call.1} parent=91 // pred_check_branch
          %1042 = sbr.rel (%p1040) target = $region96
        $region95: #{tpu_custom_call.1} parent=91 // pred_region
          %s1043 = sand.u32 %s261, 1
          %s1044 = scalar_lea.sflag [#allocation4], %s1043
          %s1045 = sand.u32 %s261, 1
          %s1046 = smul.addr %s1045, 8
          %s1047 = scalar_lea.vmem [#allocation13], %s1046
          %1048 = dma.done %s1044, 128
        $region96: #{tpu_custom_call.1} parent=91 // pred_fallthru
          _
      $region92: #{tpu_custom_call.1} parent=5 // pred_fallthru
        _
    $region6: #{tpu_custom_call.1} parent=1 // loop_footer
      %s31 = sadd.s32 1, %s27
    $region7: #{tpu_custom_call.1} parent=1 // loop_footer_branch
      %26 = sbr.rel target = $region3
    $region8: #{tpu_custom_call.1} parent=1 // loop_exit
      _
    %1049 = vsyncpa [#allocation3], 1
    %s1050 = scalar_lea.sflag [#allocation3], 1
    %1051 = vsyncpa %s1050, 1
    %1052 = vsyncpa [#allocation6], 1
    %s1053 = scalar_lea.sflag [#allocation6], 1
    %1054 = vsyncpa %s1053, 1
    %1055 = vsyncpa [#allocation9], 1
    %1056 = vsyncpa [#allocation12], 1
    %1057 = vsyncpa [#allocation4], 1
    %s1058 = scalar_lea.sflag [#allocation4], 1
    %1059 = vsyncpa %s1058, 1

</llo_original>
